<compile_context>
chip_gen: v6e
topology: v6e:2x2x1
jax: 0.10.0
libtpu: 0.0.40
codegen_flags: <defaults>
</compile_context>

<pallas_src>
import jax
import jax.numpy as jnp
from jax.experimental import pallas as pl
from jax.experimental.pallas import tpu as pltpu

_LANES = 128          # TPU lane width; hidden dim is zero-padded to this.
_MAX_BLOCK_B = 512    # batch-tile size for large batches.


def _mlp_kernel(x_ref, w1_ref, wh_ref, w6_ref, b_ref, b6_ref, o_ref):
    """Fused forward: l1 (VPU) -> 4x (MXU linear + ReLU) -> l6 (VPU + XLU)."""
    nh = wh_ref.shape[1]                                            # padded width (128)

    x = x_ref[...]                                                  # (Bb, 1) f32

    # Layer 1: n_in == 1  ->  y = x * w1_row + b1  (pure VPU, no MXU).
    h = jnp.maximum(x * w1_ref[...] + b_ref[pl.ds(0, 1), :], 0.0)   # (Bb, nh)

    # Layers 2..5: (nh x nh) matmuls on the MXU; weights sliced from the packed
    # slab at static sublane offsets (multiples of 8 -> free slicing).
    for k in range(4):
        w = wh_ref[pl.ds(k * nh, nh), :]                            # (nh, nh)
        h = jnp.dot(h, w, preferred_element_type=jnp.float32)
        h = jnp.maximum(h + b_ref[pl.ds(k + 1, 1), :], 0.0)

    # Layer 6: n_out == 1  ->  multiply + lane reduction (VPU + XLU), no MXU.
    y = jnp.sum(h * w6_ref[...], axis=-1, keepdims=True)            # (Bb, 1)
    y = y + b6_ref[0, 0]                                            # scalar bias from SMEM

    o_ref[...] = y.astype(o_ref.dtype)                              # narrow (Bb, 1) store


def pack_params(params):
    """One-time preprocessing: PyTorch-layout [(W,b)] -> packed, lane-padded slabs.

    Invariant: all padding (lanes nh..nh_pad-1) is exactly zero, including the
    bias rows, so ReLU(0)=0 keeps padded lanes zero through every layer and the
    result is bit-identical to the unpadded computation.
    """
    (w1, b1), (w2, b2), (w3, b3), (w4, b4), (w5, b5), (w6, b6) = params
    n_in, nh, n_out = w1.shape[1], w1.shape[0], w6.shape[0]
    assert n_in == 1 and n_out == 1, "optimized kernel assumes scalar in / scalar out"

    nh_pad = max(_LANES, ((nh + _LANES - 1) // _LANES) * _LANES)

    def pad_row(v):                       # (1, nh) -> (1, nh_pad)
        out = jnp.zeros((1, nh_pad), jnp.float32)
        return out.at[:, :nh].set(jnp.asarray(v, jnp.float32))

    def pad_mat(w):                       # torch (nh, nh) -> transposed, padded (nh_pad, nh_pad)
        out = jnp.zeros((nh_pad, nh_pad), jnp.float32)
        return out.at[:nh, :nh].set(jnp.asarray(w, jnp.float32).T)

    w1_row = pad_row(jnp.asarray(w1, jnp.float32).T.reshape(1, nh))      # (1, nh_pad)
    wh = jnp.concatenate([pad_mat(w) for w in (w2, w3, w4, w5)], axis=0)  # (4*nh_pad, nh_pad)
    w6_row = pad_row(jnp.asarray(w6, jnp.float32).reshape(1, nh))         # (1, nh_pad)

    b = jnp.zeros((8, nh_pad), jnp.float32)
    for i, bi in enumerate((b1, b2, b3, b4, b5)):
        b = b.at[i, :nh].set(jnp.asarray(bi, jnp.float32))                # (8, nh_pad)

    b6_s = jnp.asarray(b6, jnp.float32).reshape(1, 1)                     # (1, 1) scalar, SMEM
    return w1_row, wh, w6_row, b, b6_s


@jax.jit
def wasserstein_net_forward(x, packed):
    """x: (B, 1) float; packed = pack_params(params). Returns (B, 1) float32."""
    w1_row, wh, w6_row, b, b6_s = packed
    B = x.shape[0]
    nh_pad = wh.shape[1]

    block_b = B if B <= _MAX_BLOCK_B else _MAX_BLOCK_B
    grid = (pl.cdiv(B, block_b),)

    const = lambda i: (0, 0)   # weight / bias slabs are grid-invariant
    return pl.pallas_call(
        _mlp_kernel,
        out_shape=jax.ShapeDtypeStruct((B, 1), jnp.float32),
        grid=grid,
        in_specs=[
            pl.BlockSpec((block_b, 1), lambda i: (i, 0)),          # x
            pl.BlockSpec((1, nh_pad), const),                      # w1 row
            pl.BlockSpec((4 * nh_pad, nh_pad), const),             # hidden-weight slab
            pl.BlockSpec((1, nh_pad), const),                      # w6 row
            pl.BlockSpec((8, nh_pad), const),                      # bias slab
            pl.BlockSpec(memory_space=pltpu.MemorySpace.SMEM),     # b6 scalar
        ],
        out_specs=pl.BlockSpec((block_b, 1), lambda i: (i, 0)),
        compiler_params=pltpu.CompilerParams(
            dimension_semantics=("parallel",)),
    )(x.astype(jnp.float32), w1_row, wh, w6_row, b, b6_s)


def init_linear(key, n_in, n_out):
    """Deterministic init mimicking PyTorch nn.Linear default (uniform +-1/sqrt(n_in))."""
    kw, kb = jax.random.split(key)
    bound = 1.0 / jnp.sqrt(jnp.float32(n_in))
    W = jax.random.uniform(kw, (n_out, n_in), jnp.float32, -bound, bound)
    b = jax.random.uniform(kb, (n_out,), jnp.float32, -bound, bound)
    return W, b


def reference_forward(x, params):
    h = x
    for i, (W, b) in enumerate(params):
        h = h @ W.T + b
        if i < len(params) - 1:
            h = jnp.maximum(h, 0.0)
    return h


if __name__ == "__main__":
    key = jax.random.PRNGKey(0)

    # Shapes consistent with the module's training loop: scalar in / scalar out.
    batch, n_in, n_h, n_out = 64, 1, 32, 1

    k_x, *k_layers = jax.random.split(key, 7 + 1)
    x = jax.random.normal(k_x, (batch, n_in), jnp.float32)

    layer_dims = [(n_in, n_h), (n_h, n_h), (n_h, n_h),
                  (n_h, n_h), (n_h, n_h), (n_h, n_out)]
    params = [init_linear(k, di, do) for k, (di, do) in zip(k_layers, layer_dims)]

    packed = pack_params(params)          # done once, outside the jitted forward

    out = wasserstein_net_forward(x, packed)
    out = jax.block_until_ready(out)

    ref = reference_forward(x, params)
    assert out.shape == (batch, n_out)
    assert jnp.allclose(out, ref, atol=1e-5, rtol=1e-5), "mismatch vs reference"

    print("KERNEL_OK")
</pallas_src>

<mosaic_0001>
module attributes {stable_mosaic.version = 11 : i64} {
  func.func @_mlp_kernel(%arg0: i32, %arg1: memref<64x1xf32, #tpu.memory_space<vmem>>, %arg2: memref<1x128xf32, #tpu.memory_space<vmem>>, %arg3: memref<512x128xf32, #tpu.memory_space<vmem>>, %arg4: memref<1x128xf32, #tpu.memory_space<vmem>>, %arg5: memref<8x128xf32, #tpu.memory_space<vmem>>, %arg6: memref<1x1xf32, #tpu.memory_space<smem>>, %arg7: memref<64x1xf32, #tpu.memory_space<vmem>>) attributes {dimension_semantics = [#tpu.dimension_semantics<parallel>], iteration_bounds = array<i64: 1>, scalar_prefetch = 0 : i64, scratch_operands = 0 : i64, tpu.core_type = #tpu.core_type<tc>, window_params = [{transform_indices = @transform_0, window_bounds = array<i64: 64, 1>}, {pipeline_mode = #tpu.pipeline_mode<synchronous>, transform_indices = @transform_1, window_bounds = array<i64: 1, 128>}, {pipeline_mode = #tpu.pipeline_mode<synchronous>, transform_indices = @transform_2, window_bounds = array<i64: 512, 128>}, {pipeline_mode = #tpu.pipeline_mode<synchronous>, transform_indices = @transform_3, window_bounds = array<i64: 1, 128>}, {pipeline_mode = #tpu.pipeline_mode<synchronous>, transform_indices = @transform_4, window_bounds = array<i64: 8, 128>}, {transform_indices = @transform_5, window_bounds = array<i64: 1, 1>}, {transform_indices = @transform_6, window_bounds = array<i64: 64, 1>}]} {
    %c0 = arith.constant 0 : index
    %c0_0 = arith.constant 0 : index
    %0 = vector.load %arg1[%c0, %c0_0] : memref<64x1xf32, #tpu.memory_space<vmem>>, vector<64x1xf32>
    %c0_1 = arith.constant 0 : index
    %c0_2 = arith.constant 0 : index
    %1 = vector.load %arg2[%c0_1, %c0_2] : memref<1x128xf32, #tpu.memory_space<vmem>>, vector<1x128xf32>
    %2 = vector.broadcast %0 : vector<64x1xf32> to vector<64x128xf32>
    %3 = vector.broadcast %1 : vector<1x128xf32> to vector<64x128xf32>
    %4 = arith.mulf %2, %3 : vector<64x128xf32>
    %c0_3 = arith.constant 0 : index
    %c0_4 = arith.constant 0 : index
    %5 = vector.load %arg5[%c0_3, %c0_4] : memref<8x128xf32, #tpu.memory_space<vmem>>, vector<1x128xf32>
    %6 = vector.broadcast %5 : vector<1x128xf32> to vector<64x128xf32>
    %7 = arith.addf %4, %6 : vector<64x128xf32>
    %cst = arith.constant 0.000000e+00 : f32
    %8 = vector.broadcast %cst : f32 to vector<64x128xf32>
    %9 = arith.maximumf %7, %8 : vector<64x128xf32>
    %c0_5 = arith.constant 0 : index
    %c0_6 = arith.constant 0 : index
    %10 = vector.load %arg3[%c0_5, %c0_6] : memref<512x128xf32, #tpu.memory_space<vmem>>, vector<128x128xf32>
    %cst_7 = arith.constant dense<0.000000e+00> : vector<64x128xf32>
    %11 = tpu.matmul %9, %10, %cst_7 {dimension_numbers = #tpu.dot_dimension_numbers<[1], [0], [0], [1], [0, 0, 1, 1], [], []>} : vector<64x128xf32>, vector<128x128xf32>, vector<64x128xf32> -> vector<64x128xf32>
    %c1 = arith.constant 1 : index
    %c0_8 = arith.constant 0 : index
    %12 = vector.load %arg5[%c1, %c0_8] : memref<8x128xf32, #tpu.memory_space<vmem>>, vector<1x128xf32>
    %13 = vector.broadcast %12 : vector<1x128xf32> to vector<64x128xf32>
    %14 = arith.addf %11, %13 : vector<64x128xf32>
    %cst_9 = arith.constant 0.000000e+00 : f32
    %15 = vector.broadcast %cst_9 : f32 to vector<64x128xf32>
    %16 = arith.maximumf %14, %15 : vector<64x128xf32>
    %c128 = arith.constant 128 : index
    %c0_10 = arith.constant 0 : index
    %17 = vector.load %arg3[%c128, %c0_10] : memref<512x128xf32, #tpu.memory_space<vmem>>, vector<128x128xf32>
    %cst_11 = arith.constant dense<0.000000e+00> : vector<64x128xf32>
    %18 = tpu.matmul %16, %17, %cst_11 {dimension_numbers = #tpu.dot_dimension_numbers<[1], [0], [0], [1], [0, 0, 1, 1], [], []>} : vector<64x128xf32>, vector<128x128xf32>, vector<64x128xf32> -> vector<64x128xf32>
    %c2 = arith.constant 2 : index
    %c0_12 = arith.constant 0 : index
    %19 = vector.load %arg5[%c2, %c0_12] : memref<8x128xf32, #tpu.memory_space<vmem>>, vector<1x128xf32>
    %20 = vector.broadcast %19 : vector<1x128xf32> to vector<64x128xf32>
    %21 = arith.addf %18, %20 : vector<64x128xf32>
    %cst_13 = arith.constant 0.000000e+00 : f32
    %22 = vector.broadcast %cst_13 : f32 to vector<64x128xf32>
    %23 = arith.maximumf %21, %22 : vector<64x128xf32>
    %c256 = arith.constant 256 : index
    %c0_14 = arith.constant 0 : index
    %24 = vector.load %arg3[%c256, %c0_14] : memref<512x128xf32, #tpu.memory_space<vmem>>, vector<128x128xf32>
    %cst_15 = arith.constant dense<0.000000e+00> : vector<64x128xf32>
    %25 = tpu.matmul %23, %24, %cst_15 {dimension_numbers = #tpu.dot_dimension_numbers<[1], [0], [0], [1], [0, 0, 1, 1], [], []>} : vector<64x128xf32>, vector<128x128xf32>, vector<64x128xf32> -> vector<64x128xf32>
    %c3 = arith.constant 3 : index
    %c0_16 = arith.constant 0 : index
    %26 = vector.load %arg5[%c3, %c0_16] : memref<8x128xf32, #tpu.memory_space<vmem>>, vector<1x128xf32>
    %27 = vector.broadcast %26 : vector<1x128xf32> to vector<64x128xf32>
    %28 = arith.addf %25, %27 : vector<64x128xf32>
    %cst_17 = arith.constant 0.000000e+00 : f32
    %29 = vector.broadcast %cst_17 : f32 to vector<64x128xf32>
    %30 = arith.maximumf %28, %29 : vector<64x128xf32>
    %c384 = arith.constant 384 : index
    %c0_18 = arith.constant 0 : index
    %31 = vector.load %arg3[%c384, %c0_18] : memref<512x128xf32, #tpu.memory_space<vmem>>, vector<128x128xf32>
    %cst_19 = arith.constant dense<0.000000e+00> : vector<64x128xf32>
    %32 = tpu.matmul %30, %31, %cst_19 {dimension_numbers = #tpu.dot_dimension_numbers<[1], [0], [0], [1], [0, 0, 1, 1], [], []>} : vector<64x128xf32>, vector<128x128xf32>, vector<64x128xf32> -> vector<64x128xf32>
    %c4 = arith.constant 4 : index
    %c0_20 = arith.constant 0 : index
    %33 = vector.load %arg5[%c4, %c0_20] : memref<8x128xf32, #tpu.memory_space<vmem>>, vector<1x128xf32>
    %34 = vector.broadcast %33 : vector<1x128xf32> to vector<64x128xf32>
    %35 = arith.addf %32, %34 : vector<64x128xf32>
    %cst_21 = arith.constant 0.000000e+00 : f32
    %36 = vector.broadcast %cst_21 : f32 to vector<64x128xf32>
    %37 = arith.maximumf %35, %36 : vector<64x128xf32>
    %c0_22 = arith.constant 0 : index
    %c0_23 = arith.constant 0 : index
    %38 = vector.load %arg4[%c0_22, %c0_23] : memref<1x128xf32, #tpu.memory_space<vmem>>, vector<1x128xf32>
    %39 = vector.broadcast %38 : vector<1x128xf32> to vector<64x128xf32>
    %40 = arith.mulf %37, %39 : vector<64x128xf32>
    %cst_24 = arith.constant dense<0.000000e+00> : vector<64xf32>
    %41 = vector.multi_reduction <add>, %40, %cst_24 [1] : vector<64x128xf32> to vector<64xf32>
    %42 = vector.shape_cast %41 : vector<64xf32> to vector<64x1xf32>
    %c0_25 = arith.constant 0 : index
    %c0_26 = arith.constant 0 : index
    %43 = memref.load %arg6[%c0_25, %c0_26] : memref<1x1xf32, #tpu.memory_space<smem>>
    %44 = vector.broadcast %43 : f32 to vector<64x1xf32>
    %45 = arith.addf %42, %44 : vector<64x1xf32>
    %c0_27 = arith.constant 0 : index
    %c0_28 = arith.constant 0 : index
    %46 = vector.load %arg7[%c0_27, %c0_28] : memref<64x1xf32, #tpu.memory_space<vmem>>, vector<64x1xf32>
    tpu.vector_store %arg7[%c0_27, %c0_28], %45 {strides = array<i32>} : memref<64x1xf32, #tpu.memory_space<vmem>>, vector<64x1xf32>,
    return
  }
  func.func @transform_0(%arg0: i32) -> (i32, i32) {
    %c0_i32 = arith.constant 0 : i32
    %c0_i32_0 = arith.constant 0 : i32
    return %arg0, %c0_i32 : i32, i32
  }
  func.func @transform_1(%arg0: i32) -> (i32, i32) {
    %c0_i32 = arith.constant 0 : i32
    %c0_i32_0 = arith.constant 0 : i32
    %c0_i32_1 = arith.constant 0 : i32
    return %c0_i32, %c0_i32_0 : i32, i32
  }
  func.func @transform_2(%arg0: i32) -> (i32, i32) {
    %c0_i32 = arith.constant 0 : i32
    %c0_i32_0 = arith.constant 0 : i32
    %c0_i32_1 = arith.constant 0 : i32
    return %c0_i32, %c0_i32_0 : i32, i32
  }
  func.func @transform_3(%arg0: i32) -> (i32, i32) {
    %c0_i32 = arith.constant 0 : i32
    %c0_i32_0 = arith.constant 0 : i32
    %c0_i32_1 = arith.constant 0 : i32
    return %c0_i32, %c0_i32_0 : i32, i32
  }
  func.func @transform_4(%arg0: i32) -> (i32, i32) {
    %c0_i32 = arith.constant 0 : i32
    %c0_i32_0 = arith.constant 0 : i32
    %c0_i32_1 = arith.constant 0 : i32
    return %c0_i32, %c0_i32_0 : i32, i32
  }
  func.func @transform_5(%arg0: i32) -> (i32, i32) {
    %c0_i32 = arith.constant 0 : i32
    %c0_i32_0 = arith.constant 0 : i32
    %c0_i32_1 = arith.constant 0 : i32
    return %c0_i32, %c0_i32_0 : i32, i32
  }
  func.func @transform_6(%arg0: i32) -> (i32, i32) {
    %c0_i32 = arith.constant 0 : i32
    %c0_i32_0 = arith.constant 0 : i32
    return %arg0, %c0_i32 : i32, i32
  }
}

</mosaic_0001>

<llo_original>
// kernel: wasserstein_net_forward.1
$region0: #{wasserstein_net_forward.1}
  #allocation0 [shape = 'u32[]', space=smem, size = 0x4, offset = 0x4, fixed_abs, tag = 'smem constant byte address 0x4 - core index']
  #allocation1 [shape = 'u32[144,128]{1,0:T(1,128)}', space=vmem, size = 0x12000, scoped, tag = 'internal scratch']
  #allocation2 [shape = 'f32[1,1]{1,0:T(1,128)S(6)}', space=smem, size = 0x200, scoped, tag = 'scoped memory for wasserstein_net_forward.1']
  %s0 = inlined_call_operand.vmem [shape: f32[64,1], index: 0, kind: input, shape index: {}]
  %s1 = inlined_call_operand.vmem [shape: f32[1,128], index: 1, kind: input, shape index: {}]
  %s2 = inlined_call_operand.hbm [shape: f32[512,128], index: 2, kind: input, shape index: {}]
  %s3 = inlined_call_operand.vmem [shape: f32[1,128], index: 3, kind: input, shape index: {}]
  %s4 = inlined_call_operand.vmem [shape: f32[8,128], index: 4, kind: input, shape index: {}]
  %s5 = inlined_call_operand.<no memory space> [shape: f32[1,1], index: 5, kind: input, shape index: {}]
  %s6 = inlined_call_operand.vmem [shape: f32[64,1], index: 6, kind: output, shape index: {}]
  %s7 = sld [smem:[#allocation0]]
  $region38: #{wasserstein_net_forward.1} parent=0
    _
  %s9 = ssub.s32 1, %s7
  %s10 = scalar_select 0, %s9, %s7
  %11 = sst [smem:[#allocation2]] %s5
  $region1: #{wasserstein_net_forward.1} parent=0
    #allocation3 [shape = 'u8[262144]{0}', space=vmem, size = 0x40000, scoped, tag = 'input window, operand 2, single buffered']
    #allocation4 [shape = 's32[1]{0}', space=sflag, size = 0x4, scoped, tag = 'scoped memory for wasserstein_net_forward.1']
    %12 = vsyncpa [#allocation4], 0
    // Predicated region
    $region2: #{wasserstein_net_forward.1} parent=1 // pred_check
      _
    $region3: #{wasserstein_net_forward.1} parent=1 // pred_check_branch
      %14 = sbr.rel (0) target = $region5
    $region4: #{wasserstein_net_forward.1} parent=1 // pred_region
      _
    $region5: #{wasserstein_net_forward.1} parent=1 // pred_fallthru
      _
    // Predicated region
    $region6: #{wasserstein_net_forward.1} parent=1 // pred_check
      _
    $region7: #{wasserstein_net_forward.1} parent=1 // pred_check_branch
      %16 = sbr.rel (0) target = $region9
    $region8: #{wasserstein_net_forward.1} parent=1 // pred_region
      _
    $region9: #{wasserstein_net_forward.1} parent=1 // pred_fallthru
      _
    // Predicated region
    $region10: #{wasserstein_net_forward.1} parent=1 // pred_check
      _
    $region11: #{wasserstein_net_forward.1} parent=1 // pred_check_branch
      %18 = sbr.rel (0) target = $region13
    $region12: #{wasserstein_net_forward.1} parent=1 // pred_region
      %s20 = ssub.s32 8192, 8192
      %21 = vsyncadd [#allocation4], %s20
      %s22 = sshll.u32 [#allocation3], 4
      %s23 = int_to_ptr.vmem [resolvable:$true] %s22
      %28 = dma.hbm_to_vmem [thread:$0]  %s2, 8192, %s23, [#allocation4], 128, 128, 8
    $region13: #{wasserstein_net_forward.1} parent=1 // pred_fallthru
      _
    // Predicated region
    $region14: #{wasserstein_net_forward.1} parent=1 // pred_check
      _
    $region15: #{wasserstein_net_forward.1} parent=1 // pred_check_branch
      %30 = sbr.rel (0) target = $region17
    $region16: #{wasserstein_net_forward.1} parent=1 // pred_region
      _
    $region17: #{wasserstein_net_forward.1} parent=1 // pred_fallthru
      _
    // Predicated region
    $region18: #{wasserstein_net_forward.1} parent=1 // pred_check
      _
    $region19: #{wasserstein_net_forward.1} parent=1 // pred_check_branch
      %32 = sbr.rel (0) target = $region21
    $region20: #{wasserstein_net_forward.1} parent=1 // pred_region
      _
    $region21: #{wasserstein_net_forward.1} parent=1 // pred_fallthru
      _
    // Predicated region
    $region22: #{wasserstein_net_forward.1} parent=1 // pred_check
      _
    $region23: #{wasserstein_net_forward.1} parent=1 // pred_check_branch
      %34 = sbr.rel (0) target = $region25
    $region24: #{wasserstein_net_forward.1} parent=1 // pred_region
      _
    $region25: #{wasserstein_net_forward.1} parent=1 // pred_fallthru
      _
    // Predicated region
    $region26: #{wasserstein_net_forward.1} parent=1 // pred_check
      _
    $region27: #{wasserstein_net_forward.1} parent=1 // pred_check_branch
      %36 = sbr.rel (0) target = $region29
    $region28: #{wasserstein_net_forward.1} parent=1 // pred_region
      %37 = dma.done [#allocation4], 8192
    $region29: #{wasserstein_net_forward.1} parent=1 // pred_fallthru
      _
    %v38 = vld [vmem:[%s0] sm:$0xff]
    %v39 = vld [vmem:[%s0 + $0x8] sm:$0xff]
    %v40 = vld [vmem:[%s0 + $0x10] sm:$0xff]
    %v41 = vld [vmem:[%s0 + $0x18] sm:$0xff]
    %v42 = vld [vmem:[%s0 + $0x20] sm:$0xff]
    %v43 = vld [vmem:[%s0 + $0x28] sm:$0xff]
    %v44 = vld [vmem:[%s0 + $0x30] sm:$0xff]
    %v45 = vld [vmem:[%s0 + $0x38] sm:$0xff]
    %v46 = vld [vmem:[%s1] sm:$0x1]
    %48 = vset.pattern.permute.xlu0 0
    %49 = vperm.xlu0 %48, %v38
    %v50 = vpop.permute.xlu0 %49
    %53 = vset.pattern.permute.xlu0 0
    %54 = vperm.xlu0 %53, %v39
    %v55 = vpop.permute.xlu0 %54
    %58 = vset.pattern.permute.xlu0 0
    %59 = vperm.xlu0 %58, %v40
    %v60 = vpop.permute.xlu0 %59
    %63 = vset.pattern.permute.xlu0 0
    %64 = vperm.xlu0 %63, %v41
    %v65 = vpop.permute.xlu0 %64
    %68 = vset.pattern.permute.xlu0 0
    %69 = vperm.xlu0 %68, %v42
    %v70 = vpop.permute.xlu0 %69
    %73 = vset.pattern.permute.xlu0 0
    %74 = vperm.xlu0 %73, %v43
    %v75 = vpop.permute.xlu0 %74
    %78 = vset.pattern.permute.xlu0 0
    %79 = vperm.xlu0 %78, %v44
    %v80 = vpop.permute.xlu0 %79
    %83 = vset.pattern.permute.xlu0 0
    %84 = vperm.xlu0 %83, %v45
    %v85 = vpop.permute.xlu0 %84
    %v88 = vlaneseq
    %v89 = vshrl.u32 %v88, 7
    %v90 = vsub.s32 0, %v89
    %v91 = vrot.slane %v46, %v90
    %v93 = vmul.f32 %v50, %v91
    %v94 = vmul.f32 %v55, %v91
    %v95 = vmul.f32 %v60, %v91
    %v96 = vmul.f32 %v65, %v91
    %v97 = vmul.f32 %v70, %v91
    %v98 = vmul.f32 %v75, %v91
    %v99 = vmul.f32 %v80, %v91
    %v100 = vmul.f32 %v85, %v91
    %v101 = vld [vmem:[%s4] sm:$0x1]
    %v102 = vlaneseq
    %v103 = vshrl.u32 %v102, 7
    %v104 = vsub.s32 0, %v103
    %v105 = vrot.slane %v101, %v104
    %v106 = vadd.f32 %v93, %v105
    %v107 = vadd.f32 %v94, %v105
    %v108 = vadd.f32 %v95, %v105
    %v109 = vadd.f32 %v96, %v105
    %v110 = vadd.f32 %v97, %v105
    %v111 = vadd.f32 %v98, %v105
    %v112 = vadd.f32 %v99, %v105
    %v113 = vadd.f32 %v100, %v105
    %v114 = vmax.f32 %v106, 0.0
    %v115 = vmax.f32 %v107, 0.0
    %v116 = vmax.f32 %v108, 0.0
    %v117 = vmax.f32 %v109, 0.0
    %v118 = vmax.f32 %v110, 0.0
    %v119 = vmax.f32 %v111, 0.0
    %v120 = vmax.f32 %v112, 0.0
    %v121 = vmax.f32 %v113, 0.0
    %v122 = vld [vmem:[#allocation3] sm:$0xff]
    %v123 = vld [vmem:[#allocation3 + $0x8] sm:$0xff]
    %v124 = vld [vmem:[#allocation3 + $0x10] sm:$0xff]
    %v125 = vld [vmem:[#allocation3 + $0x18] sm:$0xff]
    %v126 = vld [vmem:[#allocation3 + $0x20] sm:$0xff]
    %v127 = vld [vmem:[#allocation3 + $0x28] sm:$0xff]
    %v128 = vld [vmem:[#allocation3 + $0x30] sm:$0xff]
    %v129 = vld [vmem:[#allocation3 + $0x38] sm:$0xff]
    %v130 = vld [vmem:[#allocation3 + $0x40] sm:$0xff]
    %v131 = vld [vmem:[#allocation3 + $0x48] sm:$0xff]
    %v132 = vld [vmem:[#allocation3 + $0x50] sm:$0xff]
    %v133 = vld [vmem:[#allocation3 + $0x58] sm:$0xff]
    %v134 = vld [vmem:[#allocation3 + $0x60] sm:$0xff]
    %v135 = vld [vmem:[#allocation3 + $0x68] sm:$0xff]
    %v136 = vld [vmem:[#allocation3 + $0x70] sm:$0xff]
    %v137 = vld [vmem:[#allocation3 + $0x78] sm:$0xff]
    %v138 = vld [vmem:[%s4 + $0x1] sm:$0x1]
    %v139 = vlaneseq
    %v140 = vshrl.u32 %v139, 7
    %v141 = vsub.s32 0, %v140
    %v142 = vrot.slane %v138, %v141
    %143 = vmatprep.subr.mxu0 0.0
    %144 = vmatpush1.msra.mxu0 %v137
    %145 = vmatprep.subr.mxu0 0.0
    %146 = vmatpush1.msra.mxu0 %v136
    %147 = vmatprep.subr.mxu0 0.0
    %148 = vmatpush1.msra.mxu0 %v135
    %149 = vmatprep.subr.mxu0 0.0
    %150 = vmatpush1.msra.mxu0 %v134
    %151 = vmatprep.subr.mxu0 0.0
    %152 = vmatpush1.msra.mxu0 %v133
    %153 = vmatprep.subr.mxu0 0.0
    %154 = vmatpush1.msra.mxu0 %v132
    %155 = vmatprep.subr.mxu0 0.0
    %156 = vmatpush1.msra.mxu0 %v131
    %157 = vmatprep.subr.mxu0 0.0
    %158 = vmatpush1.msra.mxu0 %v130
    %159 = vmatprep.subr.mxu0 0.0
    %160 = vmatpush1.msra.mxu0 %v129
    %161 = vmatprep.subr.mxu0 0.0
    %162 = vmatpush1.msra.mxu0 %v128
    %163 = vmatprep.subr.mxu0 0.0
    %164 = vmatpush1.msra.mxu0 %v127
    %165 = vmatprep.subr.mxu0 0.0
    %166 = vmatpush1.msra.mxu0 %v126
    %167 = vmatprep.subr.mxu0 0.0
    %168 = vmatpush1.msra.mxu0 %v125
    %169 = vmatprep.subr.mxu0 0.0
    %170 = vmatpush1.msra.mxu0 %v124
    %171 = vmatprep.subr.mxu0 0.0
    %172 = vmatpush1.msra.mxu0 %v123
    %173 = vmatprep.subr.mxu0 0.0
    %174 = vmatpush1.msra.mxu0 %v122
    %175 = vmatprep.subr.mxu0 0.0
    %176 = vmatpush2.msra.mxu0 0.0
    %177 = vmatprep.subr.mxu0 0.0
    %178 = vmatpush2.msra.mxu0 0.0
    %179 = vmatprep.subr.mxu0 0.0
    %180 = vmatpush2.msra.mxu0 0.0
    %181 = vmatprep.subr.mxu0 0.0
    %182 = vmatpush2.msra.mxu0 0.0
    %183 = vmatprep.subr.mxu0 0.0
    %184 = vmatpush2.msra.mxu0 0.0
    %185 = vmatprep.subr.mxu0 0.0
    %186 = vmatpush2.msra.mxu0 0.0
    %187 = vmatprep.subr.mxu0 0.0
    %188 = vmatpush2.msra.mxu0 0.0
    %189 = vmatprep.subr.mxu0 0.0
    %190 = vmatpush2.msra.mxu0 0.0
    %191 = vmatprep.subr.mxu0 0.0
    %192 = vmatpush2.msra.mxu0 0.0
    %193 = vmatprep.subr.mxu0 0.0
    %194 = vmatpush2.msra.mxu0 0.0
    %195 = vmatprep.subr.mxu0 0.0
    %196 = vmatpush2.msra.mxu0 0.0
    %197 = vmatprep.subr.mxu0 0.0
    %198 = vmatpush2.msra.mxu0 0.0
    %199 = vmatprep.subr.mxu0 0.0
    %200 = vmatpush2.msra.mxu0 0.0
    %201 = vmatprep.subr.mxu0 0.0
    %202 = vmatpush2.msra.mxu0 0.0
    %203 = vmatprep.subr.mxu0 0.0
    %204 = vmatpush2.msra.mxu0 0.0
    %205 = vmatprep.subr.mxu0 0.0
    %206 = vmatpush2.msra.mxu0 0.0
    %207 = vmatprep.mubr.f32.mxu0 0.0
    %208 = vmatmul.mubr.f32.gmra.mxu0 %v114
    %v209 = vpop.f32.mrf.mxu0
    %v210 = vadd.f32 %v142, %v209
    %v211 = vpop.f32.mrf.mxu0
    %212 = vmatprep.mubr.f32.mxu0 0.0
    %213 = vmatmul.mubr.f32.gmra.mxu0 %v115
    %v214 = vpop.f32.mrf.mxu0
    %v215 = vadd.f32 %v142, %v214
    %v216 = vpop.f32.mrf.mxu0
    %217 = vmatprep.mubr.f32.mxu0 0.0
    %218 = vmatmul.mubr.f32.gmra.mxu0 %v116
    %v219 = vpop.f32.mrf.mxu0
    %v220 = vadd.f32 %v142, %v219
    %v221 = vpop.f32.mrf.mxu0
    %222 = vmatprep.mubr.f32.mxu0 0.0
    %223 = vmatmul.mubr.f32.gmra.mxu0 %v117
    %v224 = vpop.f32.mrf.mxu0
    %v225 = vadd.f32 %v142, %v224
    %v226 = vpop.f32.mrf.mxu0
    %227 = vmatprep.mubr.f32.mxu0 0.0
    %228 = vmatmul.mubr.f32.gmra.mxu0 %v118
    %v229 = vpop.f32.mrf.mxu0
    %v230 = vadd.f32 %v142, %v229
    %v231 = vpop.f32.mrf.mxu0
    %232 = vmatprep.mubr.f32.mxu0 0.0
    %233 = vmatmul.mubr.f32.gmra.mxu0 %v119
    %v234 = vpop.f32.mrf.mxu0
    %v235 = vadd.f32 %v142, %v234
    %v236 = vpop.f32.mrf.mxu0
    %237 = vmatprep.mubr.f32.mxu0 0.0
    %238 = vmatmul.mubr.f32.gmra.mxu0 %v120
    %v239 = vpop.f32.mrf.mxu0
    %v240 = vadd.f32 %v142, %v239
    %v241 = vpop.f32.mrf.mxu0
    %242 = vmatprep.mubr.f32.mxu0 0.0
    %243 = vmatmul.mubr.f32.gmra.mxu0 %v121
    %v244 = vpop.f32.mrf.mxu0
    %v245 = vadd.f32 %v142, %v244
    %v246 = vpop.f32.mrf.mxu0
    %247 = vdwg.mxu0
    %v248 = vmax.f32 %v210, 0.0
    %v249 = vmax.f32 %v215, 0.0
    %v250 = vmax.f32 %v220, 0.0
    %v251 = vmax.f32 %v225, 0.0
    %v252 = vmax.f32 %v230, 0.0
    %v253 = vmax.f32 %v235, 0.0
    %v254 = vmax.f32 %v240, 0.0
    %v255 = vmax.f32 %v245, 0.0
    %v256 = vld [vmem:[#allocation3 + $0x80] sm:$0xff]
    %v257 = vld [vmem:[#allocation3 + $0x88] sm:$0xff]
    %v258 = vld [vmem:[#allocation3 + $0x90] sm:$0xff]
    %v259 = vld [vmem:[#allocation3 + $0x98] sm:$0xff]
    %v260 = vld [vmem:[#allocation3 + $0xa0] sm:$0xff]
    %v261 = vld [vmem:[#allocation3 + $0xa8] sm:$0xff]
    %v262 = vld [vmem:[#allocation3 + $0xb0] sm:$0xff]
    %v263 = vld [vmem:[#allocation3 + $0xb8] sm:$0xff]
    %v264 = vld [vmem:[#allocation3 + $0xc0] sm:$0xff]
    %v265 = vld [vmem:[#allocation3 + $0xc8] sm:$0xff]
    %v266 = vld [vmem:[#allocation3 + $0xd0] sm:$0xff]
    %v267 = vld [vmem:[#allocation3 + $0xd8] sm:$0xff]
    %v268 = vld [vmem:[#allocation3 + $0xe0] sm:$0xff]
    %v269 = vld [vmem:[#allocation3 + $0xe8] sm:$0xff]
    %v270 = vld [vmem:[#allocation3 + $0xf0] sm:$0xff]
    %v271 = vld [vmem:[#allocation3 + $0xf8] sm:$0xff]
    %v272 = vld [vmem:[%s4 + $0x2] sm:$0x1]
    %v273 = vlaneseq
    %v274 = vshrl.u32 %v273, 7
    %v275 = vsub.s32 0, %v274
    %v276 = vrot.slane %v272, %v275
    %277 = vmatprep.subr.mxu0 0.0
    %278 = vmatpush1.msra.mxu0 %v271
    %279 = vmatprep.subr.mxu0 0.0
    %280 = vmatpush1.msra.mxu0 %v270
    %281 = vmatprep.subr.mxu0 0.0
    %282 = vmatpush1.msra.mxu0 %v269
    %283 = vmatprep.subr.mxu0 0.0
    %284 = vmatpush1.msra.mxu0 %v268
    %285 = vmatprep.subr.mxu0 0.0
    %286 = vmatpush1.msra.mxu0 %v267
    %287 = vmatprep.subr.mxu0 0.0
    %288 = vmatpush1.msra.mxu0 %v266
    %289 = vmatprep.subr.mxu0 0.0
    %290 = vmatpush1.msra.mxu0 %v265
    %291 = vmatprep.subr.mxu0 0.0
    %292 = vmatpush1.msra.mxu0 %v264
    %293 = vmatprep.subr.mxu0 0.0
    %294 = vmatpush1.msra.mxu0 %v263
    %295 = vmatprep.subr.mxu0 0.0
    %296 = vmatpush1.msra.mxu0 %v262
    %297 = vmatprep.subr.mxu0 0.0
    %298 = vmatpush1.msra.mxu0 %v261
    %299 = vmatprep.subr.mxu0 0.0
    %300 = vmatpush1.msra.mxu0 %v260
    %301 = vmatprep.subr.mxu0 0.0
    %302 = vmatpush1.msra.mxu0 %v259
    %303 = vmatprep.subr.mxu0 0.0
    %304 = vmatpush1.msra.mxu0 %v258
    %305 = vmatprep.subr.mxu0 0.0
    %306 = vmatpush1.msra.mxu0 %v257
    %307 = vmatprep.subr.mxu0 0.0
    %308 = vmatpush1.msra.mxu0 %v256
    %309 = vmatprep.subr.mxu0 0.0
    %310 = vmatpush2.msra.mxu0 0.0
    %311 = vmatprep.subr.mxu0 0.0
    %312 = vmatpush2.msra.mxu0 0.0
    %313 = vmatprep.subr.mxu0 0.0
    %314 = vmatpush2.msra.mxu0 0.0
    %315 = vmatprep.subr.mxu0 0.0
    %316 = vmatpush2.msra.mxu0 0.0
    %317 = vmatprep.subr.mxu0 0.0
    %318 = vmatpush2.msra.mxu0 0.0
    %319 = vmatprep.subr.mxu0 0.0
    %320 = vmatpush2.msra.mxu0 0.0
    %321 = vmatprep.subr.mxu0 0.0
    %322 = vmatpush2.msra.mxu0 0.0
    %323 = vmatprep.subr.mxu0 0.0
    %324 = vmatpush2.msra.mxu0 0.0
    %325 = vmatprep.subr.mxu0 0.0
    %326 = vmatpush2.msra.mxu0 0.0
    %327 = vmatprep.subr.mxu0 0.0
    %328 = vmatpush2.msra.mxu0 0.0
    %329 = vmatprep.subr.mxu0 0.0
    %330 = vmatpush2.msra.mxu0 0.0
    %331 = vmatprep.subr.mxu0 0.0
    %332 = vmatpush2.msra.mxu0 0.0
    %333 = vmatprep.subr.mxu0 0.0
    %334 = vmatpush2.msra.mxu0 0.0
    %335 = vmatprep.subr.mxu0 0.0
    %336 = vmatpush2.msra.mxu0 0.0
    %337 = vmatprep.subr.mxu0 0.0
    %338 = vmatpush2.msra.mxu0 0.0
    %339 = vmatprep.subr.mxu0 0.0
    %340 = vmatpush2.msra.mxu0 0.0
    %341 = vmatprep.mubr.f32.mxu0 0.0
    %342 = vmatmul.mubr.f32.gmra.mxu0 %v248
    %v343 = vpop.f32.mrf.mxu0
    %v344 = vadd.f32 %v276, %v343
    %v345 = vpop.f32.mrf.mxu0
    %346 = vmatprep.mubr.f32.mxu0 0.0
    %347 = vmatmul.mubr.f32.gmra.mxu0 %v249
    %v348 = vpop.f32.mrf.mxu0
    %v349 = vadd.f32 %v276, %v348
    %v350 = vpop.f32.mrf.mxu0
    %351 = vmatprep.mubr.f32.mxu0 0.0
    %352 = vmatmul.mubr.f32.gmra.mxu0 %v250
    %v353 = vpop.f32.mrf.mxu0
    %v354 = vadd.f32 %v276, %v353
    %v355 = vpop.f32.mrf.mxu0
    %356 = vmatprep.mubr.f32.mxu0 0.0
    %357 = vmatmul.mubr.f32.gmra.mxu0 %v251
    %v358 = vpop.f32.mrf.mxu0
    %v359 = vadd.f32 %v276, %v358
    %v360 = vpop.f32.mrf.mxu0
    %361 = vmatprep.mubr.f32.mxu0 0.0
    %362 = vmatmul.mubr.f32.gmra.mxu0 %v252
    %v363 = vpop.f32.mrf.mxu0
    %v364 = vadd.f32 %v276, %v363
    %v365 = vpop.f32.mrf.mxu0
    %366 = vmatprep.mubr.f32.mxu0 0.0
    %367 = vmatmul.mubr.f32.gmra.mxu0 %v253
    %v368 = vpop.f32.mrf.mxu0
    %v369 = vadd.f32 %v276, %v368
    %v370 = vpop.f32.mrf.mxu0
    %371 = vmatprep.mubr.f32.mxu0 0.0
    %372 = vmatmul.mubr.f32.gmra.mxu0 %v254
    %v373 = vpop.f32.mrf.mxu0
    %v374 = vadd.f32 %v276, %v373
    %v375 = vpop.f32.mrf.mxu0
    %376 = vmatprep.mubr.f32.mxu0 0.0
    %377 = vmatmul.mubr.f32.gmra.mxu0 %v255
    %v378 = vpop.f32.mrf.mxu0
    %v379 = vadd.f32 %v276, %v378
    %v380 = vpop.f32.mrf.mxu0
    %381 = vdwg.mxu0
    %v382 = vmax.f32 %v344, 0.0
    %v383 = vmax.f32 %v349, 0.0
    %v384 = vmax.f32 %v354, 0.0
    %v385 = vmax.f32 %v359, 0.0
    %v386 = vmax.f32 %v364, 0.0
    %v387 = vmax.f32 %v369, 0.0
    %v388 = vmax.f32 %v374, 0.0
    %v389 = vmax.f32 %v379, 0.0
    %v390 = vld [vmem:[#allocation3 + $0x100] sm:$0xff]
    %v391 = vld [vmem:[#allocation3 + $0x108] sm:$0xff]
    %v392 = vld [vmem:[#allocation3 + $0x110] sm:$0xff]
    %v393 = vld [vmem:[#allocation3 + $0x118] sm:$0xff]
    %v394 = vld [vmem:[#allocation3 + $0x120] sm:$0xff]
    %v395 = vld [vmem:[#allocation3 + $0x128] sm:$0xff]
    %v396 = vld [vmem:[#allocation3 + $0x130] sm:$0xff]
    %v397 = vld [vmem:[#allocation3 + $0x138] sm:$0xff]
    %v398 = vld [vmem:[#allocation3 + $0x140] sm:$0xff]
    %v399 = vld [vmem:[#allocation3 + $0x148] sm:$0xff]
    %v400 = vld [vmem:[#allocation3 + $0x150] sm:$0xff]
    %v401 = vld [vmem:[#allocation3 + $0x158] sm:$0xff]
    %v402 = vld [vmem:[#allocation3 + $0x160] sm:$0xff]
    %v403 = vld [vmem:[#allocation3 + $0x168] sm:$0xff]
    %v404 = vld [vmem:[#allocation3 + $0x170] sm:$0xff]
    %v405 = vld [vmem:[#allocation3 + $0x178] sm:$0xff]
    %v406 = vld [vmem:[%s4 + $0x3] sm:$0x1]
    %v407 = vlaneseq
    %v408 = vshrl.u32 %v407, 7
    %v409 = vsub.s32 0, %v408
    %v410 = vrot.slane %v406, %v409
    %411 = vmatprep.subr.mxu0 0.0
    %412 = vmatpush1.msra.mxu0 %v405
    %413 = vmatprep.subr.mxu0 0.0
    %414 = vmatpush1.msra.mxu0 %v404
    %415 = vmatprep.subr.mxu0 0.0
    %416 = vmatpush1.msra.mxu0 %v403
    %417 = vmatprep.subr.mxu0 0.0
    %418 = vmatpush1.msra.mxu0 %v402
    %419 = vmatprep.subr.mxu0 0.0
    %420 = vmatpush1.msra.mxu0 %v401
    %421 = vmatprep.subr.mxu0 0.0
    %422 = vmatpush1.msra.mxu0 %v400
    %423 = vmatprep.subr.mxu0 0.0
    %424 = vmatpush1.msra.mxu0 %v399
    %425 = vmatprep.subr.mxu0 0.0
    %426 = vmatpush1.msra.mxu0 %v398
    %427 = vmatprep.subr.mxu0 0.0
    %428 = vmatpush1.msra.mxu0 %v397
    %429 = vmatprep.subr.mxu0 0.0
    %430 = vmatpush1.msra.mxu0 %v396
    %431 = vmatprep.subr.mxu0 0.0
    %432 = vmatpush1.msra.mxu0 %v395
    %433 = vmatprep.subr.mxu0 0.0
    %434 = vmatpush1.msra.mxu0 %v394
    %435 = vmatprep.subr.mxu0 0.0
    %436 = vmatpush1.msra.mxu0 %v393
    %437 = vmatprep.subr.mxu0 0.0
    %438 = vmatpush1.msra.mxu0 %v392
    %439 = vmatprep.subr.mxu0 0.0
    %440 = vmatpush1.msra.mxu0 %v391
    %441 = vmatprep.subr.mxu0 0.0
    %442 = vmatpush1.msra.mxu0 %v390
    %443 = vmatprep.subr.mxu0 0.0
    %444 = vmatpush2.msra.mxu0 0.0
    %445 = vmatprep.subr.mxu0 0.0
    %446 = vmatpush2.msra.mxu0 0.0
    %447 = vmatprep.subr.mxu0 0.0
    %448 = vmatpush2.msra.mxu0 0.0
    %449 = vmatprep.subr.mxu0 0.0
    %450 = vmatpush2.msra.mxu0 0.0
    %451 = vmatprep.subr.mxu0 0.0
    %452 = vmatpush2.msra.mxu0 0.0
    %453 = vmatprep.subr.mxu0 0.0
    %454 = vmatpush2.msra.mxu0 0.0
    %455 = vmatprep.subr.mxu0 0.0
    %456 = vmatpush2.msra.mxu0 0.0
    %457 = vmatprep.subr.mxu0 0.0
    %458 = vmatpush2.msra.mxu0 0.0
    %459 = vmatprep.subr.mxu0 0.0
    %460 = vmatpush2.msra.mxu0 0.0
    %461 = vmatprep.subr.mxu0 0.0
    %462 = vmatpush2.msra.mxu0 0.0
    %463 = vmatprep.subr.mxu0 0.0
    %464 = vmatpush2.msra.mxu0 0.0
    %465 = vmatprep.subr.mxu0 0.0
    %466 = vmatpush2.msra.mxu0 0.0
    %467 = vmatprep.subr.mxu0 0.0
    %468 = vmatpush2.msra.mxu0 0.0
    %469 = vmatprep.subr.mxu0 0.0
    %470 = vmatpush2.msra.mxu0 0.0
    %471 = vmatprep.subr.mxu0 0.0
    %472 = vmatpush2.msra.mxu0 0.0
    %473 = vmatprep.subr.mxu0 0.0
    %474 = vmatpush2.msra.mxu0 0.0
    %475 = vmatprep.mubr.f32.mxu0 0.0
    %476 = vmatmul.mubr.f32.gmra.mxu0 %v382
    %v477 = vpop.f32.mrf.mxu0
    %v478 = vadd.f32 %v410, %v477
    %v479 = vpop.f32.mrf.mxu0
    %480 = vmatprep.mubr.f32.mxu0 0.0
    %481 = vmatmul.mubr.f32.gmra.mxu0 %v383
    %v482 = vpop.f32.mrf.mxu0
    %v483 = vadd.f32 %v410, %v482
    %v484 = vpop.f32.mrf.mxu0
    %485 = vmatprep.mubr.f32.mxu0 0.0
    %486 = vmatmul.mubr.f32.gmra.mxu0 %v384
    %v487 = vpop.f32.mrf.mxu0
    %v488 = vadd.f32 %v410, %v487
    %v489 = vpop.f32.mrf.mxu0
    %490 = vmatprep.mubr.f32.mxu0 0.0
    %491 = vmatmul.mubr.f32.gmra.mxu0 %v385
    %v492 = vpop.f32.mrf.mxu0
    %v493 = vadd.f32 %v410, %v492
    %v494 = vpop.f32.mrf.mxu0
    %495 = vmatprep.mubr.f32.mxu0 0.0
    %496 = vmatmul.mubr.f32.gmra.mxu0 %v386
    %v497 = vpop.f32.mrf.mxu0
    %v498 = vadd.f32 %v410, %v497
    %v499 = vpop.f32.mrf.mxu0
    %500 = vmatprep.mubr.f32.mxu0 0.0
    %501 = vmatmul.mubr.f32.gmra.mxu0 %v387
    %v502 = vpop.f32.mrf.mxu0
    %v503 = vadd.f32 %v410, %v502
    %v504 = vpop.f32.mrf.mxu0
    %505 = vmatprep.mubr.f32.mxu0 0.0
    %506 = vmatmul.mubr.f32.gmra.mxu0 %v388
    %v507 = vpop.f32.mrf.mxu0
    %v508 = vadd.f32 %v410, %v507
    %v509 = vpop.f32.mrf.mxu0
    %510 = vmatprep.mubr.f32.mxu0 0.0
    %511 = vmatmul.mubr.f32.gmra.mxu0 %v389
    %v512 = vpop.f32.mrf.mxu0
    %v513 = vadd.f32 %v410, %v512
    %v514 = vpop.f32.mrf.mxu0
    %515 = vdwg.mxu0
    %v516 = vmax.f32 %v478, 0.0
    %v517 = vmax.f32 %v483, 0.0
    %v518 = vmax.f32 %v488, 0.0
    %v519 = vmax.f32 %v493, 0.0
    %v520 = vmax.f32 %v498, 0.0
    %v521 = vmax.f32 %v503, 0.0
    %v522 = vmax.f32 %v508, 0.0
    %v523 = vmax.f32 %v513, 0.0
    %v524 = vld [vmem:[#allocation3 + $0x180] sm:$0xff]
    %v525 = vld [vmem:[#allocation3 + $0x188] sm:$0xff]
    %v526 = vld [vmem:[#allocation3 + $0x190] sm:$0xff]
    %v527 = vld [vmem:[#allocation3 + $0x198] sm:$0xff]
    %v528 = vld [vmem:[#allocation3 + $0x1a0] sm:$0xff]
    %v529 = vld [vmem:[#allocation3 + $0x1a8] sm:$0xff]
    %v530 = vld [vmem:[#allocation3 + $0x1b0] sm:$0xff]
    %v531 = vld [vmem:[#allocation3 + $0x1b8] sm:$0xff]
    %v532 = vld [vmem:[#allocation3 + $0x1c0] sm:$0xff]
    %v533 = vld [vmem:[#allocation3 + $0x1c8] sm:$0xff]
    %v534 = vld [vmem:[#allocation3 + $0x1d0] sm:$0xff]
    %v535 = vld [vmem:[#allocation3 + $0x1d8] sm:$0xff]
    %v536 = vld [vmem:[#allocation3 + $0x1e0] sm:$0xff]
    %v537 = vld [vmem:[#allocation3 + $0x1e8] sm:$0xff]
    %v538 = vld [vmem:[#allocation3 + $0x1f0] sm:$0xff]
    %v539 = vld [vmem:[#allocation3 + $0x1f8] sm:$0xff]
    %v540 = vld [vmem:[%s4 + $0x4] sm:$0x1]
    %v541 = vlaneseq
    %v542 = vshrl.u32 %v541, 7
    %v543 = vsub.s32 0, %v542
    %v544 = vrot.slane %v540, %v543
    %545 = vmatprep.subr.mxu0 0.0
    %546 = vmatpush1.msra.mxu0 %v539
    %547 = vmatprep.subr.mxu0 0.0
    %548 = vmatpush1.msra.mxu0 %v538
    %549 = vmatprep.subr.mxu0 0.0
    %550 = vmatpush1.msra.mxu0 %v537
    %551 = vmatprep.subr.mxu0 0.0
    %552 = vmatpush1.msra.mxu0 %v536
    %553 = vmatprep.subr.mxu0 0.0
    %554 = vmatpush1.msra.mxu0 %v535
    %555 = vmatprep.subr.mxu0 0.0
    %556 = vmatpush1.msra.mxu0 %v534
    %557 = vmatprep.subr.mxu0 0.0
    %558 = vmatpush1.msra.mxu0 %v533
    %559 = vmatprep.subr.mxu0 0.0
    %560 = vmatpush1.msra.mxu0 %v532
    %561 = vmatprep.subr.mxu0 0.0
    %562 = vmatpush1.msra.mxu0 %v531
    %563 = vmatprep.subr.mxu0 0.0
    %564 = vmatpush1.msra.mxu0 %v530
    %565 = vmatprep.subr.mxu0 0.0
    %566 = vmatpush1.msra.mxu0 %v529
    %567 = vmatprep.subr.mxu0 0.0
    %568 = vmatpush1.msra.mxu0 %v528
    %569 = vmatprep.subr.mxu0 0.0
    %570 = vmatpush1.msra.mxu0 %v527
    %571 = vmatprep.subr.mxu0 0.0
    %572 = vmatpush1.msra.mxu0 %v526
    %573 = vmatprep.subr.mxu0 0.0
    %574 = vmatpush1.msra.mxu0 %v525
    %575 = vmatprep.subr.mxu0 0.0
    %576 = vmatpush1.msra.mxu0 %v524
    %577 = vmatprep.subr.mxu0 0.0
    %578 = vmatpush2.msra.mxu0 0.0
    %579 = vmatprep.subr.mxu0 0.0
    %580 = vmatpush2.msra.mxu0 0.0
    %581 = vmatprep.subr.mxu0 0.0
    %582 = vmatpush2.msra.mxu0 0.0
    %583 = vmatprep.subr.mxu0 0.0
    %584 = vmatpush2.msra.mxu0 0.0
    %585 = vmatprep.subr.mxu0 0.0
    %586 = vmatpush2.msra.mxu0 0.0
    %587 = vmatprep.subr.mxu0 0.0
    %588 = vmatpush2.msra.mxu0 0.0
    %589 = vmatprep.subr.mxu0 0.0
    %590 = vmatpush2.msra.mxu0 0.0
    %591 = vmatprep.subr.mxu0 0.0
    %592 = vmatpush2.msra.mxu0 0.0
    %593 = vmatprep.subr.mxu0 0.0
    %594 = vmatpush2.msra.mxu0 0.0
    %595 = vmatprep.subr.mxu0 0.0
    %596 = vmatpush2.msra.mxu0 0.0
    %597 = vmatprep.subr.mxu0 0.0
    %598 = vmatpush2.msra.mxu0 0.0
    %599 = vmatprep.subr.mxu0 0.0
    %600 = vmatpush2.msra.mxu0 0.0
    %601 = vmatprep.subr.mxu0 0.0
    %602 = vmatpush2.msra.mxu0 0.0
    %603 = vmatprep.subr.mxu0 0.0
    %604 = vmatpush2.msra.mxu0 0.0
    %605 = vmatprep.subr.mxu0 0.0
    %606 = vmatpush2.msra.mxu0 0.0
    %607 = vmatprep.subr.mxu0 0.0
    %608 = vmatpush2.msra.mxu0 0.0
    %609 = vmatprep.mubr.f32.mxu0 0.0
    %610 = vmatmul.mubr.f32.gmra.mxu0 %v516
    %v611 = vpop.f32.mrf.mxu0
    %v612 = vadd.f32 %v544, %v611
    %v613 = vpop.f32.mrf.mxu0
    %614 = vmatprep.mubr.f32.mxu0 0.0
    %615 = vmatmul.mubr.f32.gmra.mxu0 %v517
    %v616 = vpop.f32.mrf.mxu0
    %v617 = vadd.f32 %v544, %v616
    %v618 = vpop.f32.mrf.mxu0
    %619 = vmatprep.mubr.f32.mxu0 0.0
    %620 = vmatmul.mubr.f32.gmra.mxu0 %v518
    %v621 = vpop.f32.mrf.mxu0
    %v622 = vadd.f32 %v544, %v621
    %v623 = vpop.f32.mrf.mxu0
    %624 = vmatprep.mubr.f32.mxu0 0.0
    %625 = vmatmul.mubr.f32.gmra.mxu0 %v519
    %v626 = vpop.f32.mrf.mxu0
    %v627 = vadd.f32 %v544, %v626
    %v628 = vpop.f32.mrf.mxu0
    %629 = vmatprep.mubr.f32.mxu0 0.0
    %630 = vmatmul.mubr.f32.gmra.mxu0 %v520
    %v631 = vpop.f32.mrf.mxu0
    %v632 = vadd.f32 %v544, %v631
    %v633 = vpop.f32.mrf.mxu0
    %634 = vmatprep.mubr.f32.mxu0 0.0
    %635 = vmatmul.mubr.f32.gmra.mxu0 %v521
    %v636 = vpop.f32.mrf.mxu0
    %v637 = vadd.f32 %v544, %v636
    %v638 = vpop.f32.mrf.mxu0
    %639 = vmatprep.mubr.f32.mxu0 0.0
    %640 = vmatmul.mubr.f32.gmra.mxu0 %v522
    %v641 = vpop.f32.mrf.mxu0
    %v642 = vadd.f32 %v544, %v641
    %v643 = vpop.f32.mrf.mxu0
    %644 = vmatprep.mubr.f32.mxu0 0.0
    %645 = vmatmul.mubr.f32.gmra.mxu0 %v523
    %v646 = vpop.f32.mrf.mxu0
    %v647 = vadd.f32 %v544, %v646
    %v648 = vpop.f32.mrf.mxu0
    %649 = vdwg.mxu0
    %v650 = vmax.f32 %v612, 0.0
    %v651 = vmax.f32 %v617, 0.0
    %v652 = vmax.f32 %v622, 0.0
    %v653 = vmax.f32 %v627, 0.0
    %v654 = vmax.f32 %v632, 0.0
    %v655 = vmax.f32 %v637, 0.0
    %v656 = vmax.f32 %v642, 0.0
    %v657 = vmax.f32 %v647, 0.0
    %v658 = vld [vmem:[%s3] sm:$0x1]
    %v660 = vlaneseq
    %v661 = vshrl.u32 %v660, 7
    %v662 = vsub.s32 0, %v661
    %v663 = vrot.slane %v658, %v662
    %v665 = vmul.f32 %v650, %v663
    %v666 = vmul.f32 %v651, %v663
    %v667 = vmul.f32 %v652, %v663
    %v668 = vmul.f32 %v653, %v663
    %v669 = vmul.f32 %v654, %v663
    %v670 = vmul.f32 %v655, %v663
    %v671 = vmul.f32 %v656, %v663
    %v672 = vmul.f32 %v657, %v663
    %673 = vadd.xlane.f32.xlu0 %v665
    %v674 = vpop.xlane.xlu0 %673
    %675 = vadd.xlane.f32.xlu0 %v666
    %v676 = vpop.xlane.xlu0 %675
    %677 = vadd.xlane.f32.xlu0 %v667
    %v678 = vpop.xlane.xlu0 %677
    %679 = vadd.xlane.f32.xlu0 %v668
    %v680 = vpop.xlane.xlu0 %679
    %681 = vadd.xlane.f32.xlu0 %v669
    %v682 = vpop.xlane.xlu0 %681
    %683 = vadd.xlane.f32.xlu0 %v670
    %v684 = vpop.xlane.xlu0 %683
    %685 = vadd.xlane.f32.xlu0 %v671
    %v686 = vpop.xlane.xlu0 %685
    %687 = vadd.xlane.f32.xlu0 %v672
    %v688 = vpop.xlane.xlu0 %687
    %s689 = sld [smem:[#allocation2]]
    %v690 = vstv %s689
    %v691 = vadd.f32 %v674, %v690
    %v692 = vadd.f32 %v676, %v690
    %v693 = vadd.f32 %v678, %v690
    %v694 = vadd.f32 %v680, %v690
    %v695 = vadd.f32 %v682, %v690
    %v696 = vadd.f32 %v684, %v690
    %v697 = vadd.f32 %v686, %v690
    %v698 = vadd.f32 %v688, %v690
    %vm699 = vcmask 7168
    %700 = vst.msk [vmem:[%s6] sm:$0xff] %vm699, %v691
    %701 = vst.msk [vmem:[%s6 + $0x8] sm:$0xff] %vm699, %v692
    %702 = vst.msk [vmem:[%s6 + $0x10] sm:$0xff] %vm699, %v693
    %703 = vst.msk [vmem:[%s6 + $0x18] sm:$0xff] %vm699, %v694
    %704 = vst.msk [vmem:[%s6 + $0x20] sm:$0xff] %vm699, %v695
    %705 = vst.msk [vmem:[%s6 + $0x28] sm:$0xff] %vm699, %v696
    %706 = vst.msk [vmem:[%s6 + $0x30] sm:$0xff] %vm699, %v697
    %707 = vst.msk [vmem:[%s6 + $0x38] sm:$0xff] %vm699, %v698
    // Predicated region
    $region30: #{wasserstein_net_forward.1} parent=1 // pred_check
      _
    $region31: #{wasserstein_net_forward.1} parent=1 // pred_check_branch
      %709 = sbr.rel (0) target = $region33
    $region32: #{wasserstein_net_forward.1} parent=1 // pred_region
      _
    $region33: #{wasserstein_net_forward.1} parent=1 // pred_fallthru
      _
    // Predicated region
    $region34: #{wasserstein_net_forward.1} parent=1 // pred_check
      _
    $region35: #{wasserstein_net_forward.1} parent=1 // pred_check_branch
      %711 = sbr.rel (0) target = $region37
    $region36: #{wasserstein_net_forward.1} parent=1 // pred_region
      _
    $region37: #{wasserstein_net_forward.1} parent=1 // pred_fallthru
      _
    %712 = vsyncpa [#allocation4], 1

</llo_original>
